<compile_context>
chip_gen: v7x
topology: tpu7x:2x2x1
jax: 0.10.0
libtpu: 0.0.40
codegen_flags: <defaults>
</compile_context>

<pallas_src>
import functools

import jax
import jax.numpy as jnp
from jax.experimental import pallas as pl
from jax.experimental.pallas import tpu as pltpu

LANE = 128


def _round_up(n, m):
    return ((n + m - 1) // m) * m


# -----------------------------------------------------------------------------
# Kernel
# -----------------------------------------------------------------------------
def dqn_kernel(x_ref, w0_ref, w1_ref, ws_ref, b_ref, o_ref):
    """Full DQN forward on resident VMEM tiles.

    x_ref : (TB, num_input)            f32 or bf16
    w0_ref: (num_input, 512)           bf16
    w1_ref: (512, 128)                 bf16
    ws_ref: (128, 128 + out_pad)       bf16  [cols 0:128 = padded w2, 128: = padded wo]
    b_ref : (4, max_width)             f32   (packed biases, zero padded)
    o_ref : (TB, out_pad)              f32   (padded lanes are exact zeros)
    """
    b_all = b_ref[...]                       # single load of all biases
    n0 = w0_ref.shape[1]                     # 512
    n1 = w1_ref.shape[1]                     # 128
    out_pad = o_ref.shape[1]                 # >= 128, lane-aligned

    x = x_ref[...]
    if x.dtype != jnp.bfloat16:
        x = x.astype(jnp.bfloat16)

    # hidden 0: Linear(num_input -> 512) + ReLU
    h = jnp.dot(x, w0_ref[...], preferred_element_type=jnp.float32) + b_all[0:1, :n0]
    h = jnp.maximum(h, 0.0)

    # hidden 1: Linear(512 -> 128) + ReLU
    h = jnp.dot(h.astype(jnp.bfloat16), w1_ref[...],
                preferred_element_type=jnp.float32) + b_all[1:2, :n1]
    h = jnp.maximum(h, 0.0)

    # small-weight slab: padded w2 (128,128) and padded wo (128,out_pad)
    ws = ws_ref[...]
    w2 = ws[:, :LANE]
    wo = ws[:, LANE:]

    # hidden 2: Linear(128 -> 32) + ReLU, zero-padded to 128 lanes
    h = jnp.dot(h.astype(jnp.bfloat16), w2,
                preferred_element_type=jnp.float32) + b_all[2:3, :LANE]
    h = jnp.maximum(h, 0.0)

    # output: Linear(32 -> num_output), no activation, zero-padded to out_pad lanes
    out = jnp.dot(h.astype(jnp.bfloat16), wo,
                  preferred_element_type=jnp.float32) + b_all[3:4, :out_pad]
    o_ref[...] = out.astype(o_ref.dtype)


# -----------------------------------------------------------------------------
# Wrapper
# -----------------------------------------------------------------------------
@functools.partial(jax.jit, static_argnames=("num_output", "block_b"))
def dqn_forward(x, w0, w1, wsmall, bias_pack, *, num_output, block_b=2048):
    """x: (B, num_input) f32/bf16; w0,w1,wsmall: bf16; bias_pack: (4, max_w) f32."""
    B, num_input = x.shape
    out_pad = wsmall.shape[1] - LANE         # lane-aligned output width (>= 128)

    # Batch tile: maximal block on 1-TC chips; >= 2 blocks at training-sized B so
    # v7x's 2 TensorCores both get work via the "parallel" grid axis.
    if B >= 1024:
        tb = min(block_b, _round_up(pl.cdiv(B, 2), 8))
    else:
        tb = min(block_b, B)
    grid = (pl.cdiv(B, tb),)

    resident = lambda i: (0, 0)              # weights/biases stay VMEM-resident
    batch_tiled = lambda i: (i, 0)           # x / out walk the batch axis

    flops = 2 * B * (w0.shape[0] * w0.shape[1] + w1.shape[0] * w1.shape[1]
                     + LANE * LANE + LANE * out_pad)
    bytes_accessed = (
        x.size * x.dtype.itemsize
        + w0.size * w0.dtype.itemsize
        + w1.size * w1.dtype.itemsize
        + wsmall.size * wsmall.dtype.itemsize
        + bias_pack.size * bias_pack.dtype.itemsize
        + B * out_pad * 4)

    out_padded = pl.pallas_call(
        dqn_kernel,
        out_shape=jax.ShapeDtypeStruct((B, out_pad), jnp.float32),
        grid=grid,
        in_specs=[
            pl.BlockSpec((tb, num_input), batch_tiled),
            pl.BlockSpec(w0.shape, resident),
            pl.BlockSpec(w1.shape, resident),
            pl.BlockSpec(wsmall.shape, resident),
            pl.BlockSpec(bias_pack.shape, resident),
        ],
        out_specs=pl.BlockSpec((tb, out_pad), batch_tiled),
        compiler_params=pltpu.CompilerParams(dimension_semantics=("parallel",)),
        cost_estimate=pl.CostEstimate(flops=flops, transcendentals=0,
                                      bytes_accessed=bytes_accessed),
    )(x, w0, w1, wsmall, bias_pack)

    # Padded lanes are exact zeros (zero-padded weights AND biases); slice here,
    # not inside the kernel, so the kernel's stores stay lane-dense.
    return out_padded[:, :num_output]


# -----------------------------------------------------------------------------
# Parameter construction / one-time inference prep
# -----------------------------------------------------------------------------
def make_dqn_params(key, num_input, num_output,
                    hidden_state_neurons=(1024, 512, 128, 32)):
    """Mirror the PyTorch constructor and default Linear init U(+-1/sqrt(fan_in)).
    Weights are stored pre-transposed as (in, out) so the kernel computes x @ W."""
    hs = list(hidden_state_neurons)
    dims = []
    for i in range(len(hs) - 1):
        dim_in = num_input if i == 0 else hs[i]
        dims.append((dim_in, hs[i + 1]))
    dims.append((hs[-1], num_output))        # self.out

    params = []
    for (din, dout) in dims:
        key, kw, kb = jax.random.split(key, 3)
        bound = float(din) ** -0.5
        w = jax.random.uniform(kw, (din, dout), jnp.float32, -bound, bound)
        b = jax.random.uniform(kb, (dout,), jnp.float32, -bound, bound)
        params.append((w, b))
    return params


def prepare_inference_params(params):
    """One-time prep (outside the hot loop).

    * w0, w1 -> bf16 as-is.
    * w2 zero-padded to (128, 128) and wo zero-padded to (128, out_pad), packed
      side-by-side into ONE bf16 slab (128, 128 + out_pad) -> one DMA.
    * the 4 bias vectors packed (zero padded) into one (4, max_width) f32 array.
    Zero padding guarantees padded output lanes are exactly 0.
    """
    (w0, b0), (w1, b1), (w2, b2), (wo, bo) = params
    num_output = wo.shape[1]
    out_pad = _round_up(max(num_output, LANE), LANE)

    w2p = jnp.zeros((w2.shape[0], LANE), jnp.float32).at[:, :w2.shape[1]].set(w2)
    wop = jnp.zeros((LANE, out_pad), jnp.float32).at[:wo.shape[0], :num_output].set(wo)
    wsmall = jnp.concatenate([w2p, wop], axis=1).astype(jnp.bfloat16)

    width = max(w0.shape[1], w1.shape[1], LANE, out_pad)
    bias_pack = jnp.zeros((4, width), jnp.float32)
    for i, b in enumerate((b0, b1, b2, bo)):
        bias_pack = bias_pack.at[i, :b.shape[0]].set(b)

    return w0.astype(jnp.bfloat16), w1.astype(jnp.bfloat16), wsmall, bias_pack


def dqn_reference(x, params):
    """Pure-JAX reference with the same numerics as the kernel
    (bf16 matmul operands, f32 accumulation, f32 bias-add / ReLU)."""
    h = x
    for (w, b) in params[:-1]:
        h = jnp.dot(h.astype(jnp.bfloat16), w.astype(jnp.bfloat16),
                    preferred_element_type=jnp.float32) + b
        h = jnp.maximum(h, 0.0)
    w, b = params[-1]
    return jnp.dot(h.astype(jnp.bfloat16), w.astype(jnp.bfloat16),
                   preferred_element_type=jnp.float32) + b


if __name__ == "__main__":
    key = jax.random.PRNGKey(0)
    k_x, k_p = jax.random.split(key)

    batch = 2
    num_input = 64
    num_output = 8

    x = jax.random.normal(k_x, (batch, num_input), jnp.float32)
    params = make_dqn_params(k_p, num_input, num_output)
    w0, w1, wsmall, bias_pack = prepare_inference_params(params)

    out = dqn_forward(x, w0, w1, wsmall, bias_pack, num_output=num_output)
    out = jax.block_until_ready(out)

    ref = dqn_reference(x, params)
    assert out.shape == (batch, num_output), out.shape
    err = float(jnp.max(jnp.abs(out - ref)))
    assert err < 5e-3, f"max abs err {err}"

    print("KERNEL_OK")
</pallas_src>

<mosaic_0001>
module attributes {stable_mosaic.version = 11 : i64} {
  func.func @dqn_kernel(%arg0: i32, %arg1: memref<2x64xf32, #tpu.memory_space<vmem>>, %arg2: memref<64x512xbf16, #tpu.memory_space<vmem>>, %arg3: memref<512x128xbf16, #tpu.memory_space<vmem>>, %arg4: memref<128x256xbf16, #tpu.memory_space<vmem>>, %arg5: memref<4x512xf32, #tpu.memory_space<vmem>>, %arg6: memref<2x128xf32, #tpu.memory_space<vmem>>) attributes {dimension_semantics = [#tpu.dimension_semantics<parallel>], iteration_bounds = array<i64: 1>, scalar_prefetch = 0 : i64, scratch_operands = 0 : i64, tpu.core_type = #tpu.core_type<tc>, window_params = [{transform_indices = @transform_0, window_bounds = array<i64: 2, 64>}, {pipeline_mode = #tpu.pipeline_mode<synchronous>, transform_indices = @transform_1, window_bounds = array<i64: 64, 512>}, {pipeline_mode = #tpu.pipeline_mode<synchronous>, transform_indices = @transform_2, window_bounds = array<i64: 512, 128>}, {pipeline_mode = #tpu.pipeline_mode<synchronous>, transform_indices = @transform_3, window_bounds = array<i64: 128, 256>}, {pipeline_mode = #tpu.pipeline_mode<synchronous>, transform_indices = @transform_4, window_bounds = array<i64: 4, 512>}, {transform_indices = @transform_5, window_bounds = array<i64: 2, 128>}]} {
    %c0 = arith.constant 0 : index
    %c0_0 = arith.constant 0 : index
    %0 = vector.load %arg5[%c0, %c0_0] : memref<4x512xf32, #tpu.memory_space<vmem>>, vector<4x512xf32>
    %c0_1 = arith.constant 0 : index
    %c0_2 = arith.constant 0 : index
    %1 = vector.load %arg1[%c0_1, %c0_2] : memref<2x64xf32, #tpu.memory_space<vmem>>, vector<2x64xf32>
    %2 = arith.truncf %1 : vector<2x64xf32> to vector<2x64xbf16>
    %c0_3 = arith.constant 0 : index
    %c0_4 = arith.constant 0 : index
    %3 = vector.load %arg2[%c0_3, %c0_4] : memref<64x512xbf16, #tpu.memory_space<vmem>>, vector<64x512xbf16>
    %cst = arith.constant dense<0.000000e+00> : vector<2x512xf32>
    %4 = tpu.matmul %2, %3, %cst {dimension_numbers = #tpu.dot_dimension_numbers<[1], [0], [0], [1], [0, 0, 1, 1], [], []>} : vector<2x64xbf16>, vector<64x512xbf16>, vector<2x512xf32> -> vector<2x512xf32>
    %5 = vector.extract_strided_slice %0 {offsets = [0, 0], sizes = [1, 512], strides = [1, 1]} : vector<4x512xf32> to vector<1x512xf32>
    %6 = vector.broadcast %5 : vector<1x512xf32> to vector<2x512xf32>
    %7 = arith.addf %4, %6 : vector<2x512xf32>
    %cst_5 = arith.constant 0.000000e+00 : f32
    %8 = vector.broadcast %cst_5 : f32 to vector<2x512xf32>
    %9 = arith.maximumf %7, %8 : vector<2x512xf32>
    %10 = arith.truncf %9 : vector<2x512xf32> to vector<2x512xbf16>
    %c0_6 = arith.constant 0 : index
    %c0_7 = arith.constant 0 : index
    %11 = vector.load %arg3[%c0_6, %c0_7] : memref<512x128xbf16, #tpu.memory_space<vmem>>, vector<512x128xbf16>
    %cst_8 = arith.constant dense<0.000000e+00> : vector<2x128xf32>
    %12 = tpu.matmul %10, %11, %cst_8 {dimension_numbers = #tpu.dot_dimension_numbers<[1], [0], [0], [1], [0, 0, 1, 1], [], []>} : vector<2x512xbf16>, vector<512x128xbf16>, vector<2x128xf32> -> vector<2x128xf32>
    %13 = vector.extract_strided_slice %0 {offsets = [1, 0], sizes = [1, 128], strides = [1, 1]} : vector<4x512xf32> to vector<1x128xf32>
    %14 = vector.broadcast %13 : vector<1x128xf32> to vector<2x128xf32>
    %15 = arith.addf %12, %14 : vector<2x128xf32>
    %cst_9 = arith.constant 0.000000e+00 : f32
    %16 = vector.broadcast %cst_9 : f32 to vector<2x128xf32>
    %17 = arith.maximumf %15, %16 : vector<2x128xf32>
    %c0_10 = arith.constant 0 : index
    %c0_11 = arith.constant 0 : index
    %18 = vector.load %arg4[%c0_10, %c0_11] : memref<128x256xbf16, #tpu.memory_space<vmem>>, vector<128x256xbf16>
    %19 = vector.extract_strided_slice %18 {offsets = [0, 0], sizes = [128, 128], strides = [1, 1]} : vector<128x256xbf16> to vector<128x128xbf16>
    %20 = vector.extract_strided_slice %18 {offsets = [0, 128], sizes = [128, 128], strides = [1, 1]} : vector<128x256xbf16> to vector<128x128xbf16>
    %21 = arith.truncf %17 : vector<2x128xf32> to vector<2x128xbf16>
    %cst_12 = arith.constant dense<0.000000e+00> : vector<2x128xf32>
    %22 = tpu.matmul %21, %19, %cst_12 {dimension_numbers = #tpu.dot_dimension_numbers<[1], [0], [0], [1], [0, 0, 1, 1], [], []>} : vector<2x128xbf16>, vector<128x128xbf16>, vector<2x128xf32> -> vector<2x128xf32>
    %23 = vector.extract_strided_slice %0 {offsets = [2, 0], sizes = [1, 128], strides = [1, 1]} : vector<4x512xf32> to vector<1x128xf32>
    %24 = vector.broadcast %23 : vector<1x128xf32> to vector<2x128xf32>
    %25 = arith.addf %22, %24 : vector<2x128xf32>
    %cst_13 = arith.constant 0.000000e+00 : f32
    %26 = vector.broadcast %cst_13 : f32 to vector<2x128xf32>
    %27 = arith.maximumf %25, %26 : vector<2x128xf32>
    %28 = arith.truncf %27 : vector<2x128xf32> to vector<2x128xbf16>
    %cst_14 = arith.constant dense<0.000000e+00> : vector<2x128xf32>
    %29 = tpu.matmul %28, %20, %cst_14 {dimension_numbers = #tpu.dot_dimension_numbers<[1], [0], [0], [1], [0, 0, 1, 1], [], []>} : vector<2x128xbf16>, vector<128x128xbf16>, vector<2x128xf32> -> vector<2x128xf32>
    %30 = vector.extract_strided_slice %0 {offsets = [3, 0], sizes = [1, 128], strides = [1, 1]} : vector<4x512xf32> to vector<1x128xf32>
    %31 = vector.broadcast %30 : vector<1x128xf32> to vector<2x128xf32>
    %32 = arith.addf %29, %31 : vector<2x128xf32>
    %c0_15 = arith.constant 0 : index
    %c0_16 = arith.constant 0 : index
    %33 = vector.load %arg6[%c0_15, %c0_16] : memref<2x128xf32, #tpu.memory_space<vmem>>, vector<2x128xf32>
    tpu.vector_store %arg6[%c0_15, %c0_16], %32 {strides = array<i32>} : memref<2x128xf32, #tpu.memory_space<vmem>>, vector<2x128xf32>,
    return
  }
  func.func @transform_0(%arg0: i32) -> (i32, i32) {
    %c0_i32 = arith.constant 0 : i32
    %c0_i32_0 = arith.constant 0 : i32
    return %arg0, %c0_i32 : i32, i32
  }
  func.func @transform_1(%arg0: i32) -> (i32, i32) {
    %c0_i32 = arith.constant 0 : i32
    %c0_i32_0 = arith.constant 0 : i32
    %c0_i32_1 = arith.constant 0 : i32
    return %c0_i32, %c0_i32_0 : i32, i32
  }
  func.func @transform_2(%arg0: i32) -> (i32, i32) {
    %c0_i32 = arith.constant 0 : i32
    %c0_i32_0 = arith.constant 0 : i32
    %c0_i32_1 = arith.constant 0 : i32
    return %c0_i32, %c0_i32_0 : i32, i32
  }
  func.func @transform_3(%arg0: i32) -> (i32, i32) {
    %c0_i32 = arith.constant 0 : i32
    %c0_i32_0 = arith.constant 0 : i32
    %c0_i32_1 = arith.constant 0 : i32
    return %c0_i32, %c0_i32_0 : i32, i32
  }
  func.func @transform_4(%arg0: i32) -> (i32, i32) {
    %c0_i32 = arith.constant 0 : i32
    %c0_i32_0 = arith.constant 0 : i32
    %c0_i32_1 = arith.constant 0 : i32
    return %c0_i32, %c0_i32_0 : i32, i32
  }
  func.func @transform_5(%arg0: i32) -> (i32, i32) {
    %c0_i32 = arith.constant 0 : i32
    %c0_i32_0 = arith.constant 0 : i32
    return %arg0, %c0_i32 : i32, i32
  }
}

</mosaic_0001>

<llo_original>
// kernel: dqn_forward.1
$region0: #{dqn_forward.1}
  #allocation0 [shape = 'u32[]', space=smem, size = 0x4, offset = 0x4, fixed_abs, tag = 'smem constant byte address 0x4 - core index']
  #allocation1 [shape = 'u32[144,128]{1,0:T(1,128)}', space=vmem, size = 0x12000, scoped, tag = 'internal scratch']
  %s0 = inlined_call_operand.hbm [shape: f32[2,64], index: 0, kind: input, shape index: {}]
  %s1 = inlined_call_operand.hbm [shape: bf16[64,512], index: 1, kind: input, shape index: {}]
  %s2 = inlined_call_operand.hbm [shape: bf16[512,128], index: 2, kind: input, shape index: {}]
  %s3 = inlined_call_operand.hbm [shape: bf16[128,256], index: 3, kind: input, shape index: {}]
  %s4 = inlined_call_operand.hbm [shape: f32[4,512], index: 4, kind: input, shape index: {}]
  %s5 = inlined_call_operand.hbm [shape: f32[2,128], index: 5, kind: output, shape index: {}]
  %s6 = sld [smem:[#allocation0]]
  $region50: #{dqn_forward.1} parent=0
    _
  %s8 = ssub.s32 1, %s6
  %s9 = scalar_select 0, %s8, %s6
  $region1: #{dqn_forward.1} parent=0
    #allocation2 [shape = 'u8[1024]{0}', space=vmem, size = 0x400, scoped, tag = 'input window, operand 0, single buffered']
    #allocation3 [shape = 's32[1]{0}', space=sflag, size = 0x4, scoped, tag = 'scoped memory for dqn_forward.1']
    #allocation4 [shape = 's32[1]{0}', space=sflag, size = 0x4, scoped, tag = 'scoped memory for dqn_forward.1']
    #allocation5 [shape = 'u8[65536]{0}', space=vmem, size = 0x10000, scoped, tag = 'input window, operand 1, single buffered']
    #allocation6 [shape = 's32[1]{0}', space=sflag, size = 0x4, scoped, tag = 'scoped memory for dqn_forward.1']
    #allocation7 [shape = 'u8[131072]{0}', space=vmem, size = 0x20000, scoped, tag = 'input window, operand 2, single buffered']
    #allocation8 [shape = 'u8[65536]{0}', space=vmem, size = 0x10000, scoped, tag = 'input window, operand 3, single buffered']
    #allocation9 [shape = 's32[1]{0}', space=sflag, size = 0x4, scoped, tag = 'scoped memory for dqn_forward.1']
    #allocation10 [shape = 'u8[8192]{0}', space=vmem, size = 0x2000, scoped, tag = 'input window, operand 4, single buffered']
    #allocation11 [shape = 'u8[1024]{0}', space=vmem, size = 0x400, scoped, tag = 'output window, operand 0, single buffered']
    %10 = vsyncpa [#allocation3], 0
    %11 = vsyncpa [#allocation6], 0
    %12 = vsyncpa [#allocation9], 0
    %13 = vsyncpa [#allocation4], 0
    // Predicated region
    $region2: #{dqn_forward.1} parent=1 // pred_check
      _
    $region3: #{dqn_forward.1} parent=1 // pred_check_branch
      %15 = sbr.rel (0) target = $region5
    $region4: #{dqn_forward.1} parent=1 // pred_region
      %s17 = ssub.s32 32, 32
      %18 = vsyncadd [#allocation3], %s17
      %s20 = sshll.u32 [#allocation2], 4
      %s21 = int_to_ptr.vmem [resolvable:$true] %s20
      %23 = dma.hbm_to_vmem [thread:$0]  %s0, 32, %s21, [#allocation3]
    $region5: #{dqn_forward.1} parent=1 // pred_fallthru
      _
    // Predicated region
    $region6: #{dqn_forward.1} parent=1 // pred_check
      _
    $region7: #{dqn_forward.1} parent=1 // pred_check_branch
      %25 = sbr.rel (0) target = $region9
    $region8: #{dqn_forward.1} parent=1 // pred_region
      %s27 = ssub.s32 2048, 2048
      %28 = vsyncadd [#allocation6], %s27
      %s29 = sshll.u32 [#allocation5], 4
      %s30 = int_to_ptr.vmem [resolvable:$true] %s29
      %35 = dma.hbm_to_vmem [thread:$0]  %s1, 2048, %s30, [#allocation6], 256, 256, 16
    $region9: #{dqn_forward.1} parent=1 // pred_fallthru
      _
    // Predicated region
    $region10: #{dqn_forward.1} parent=1 // pred_check
      _
    $region11: #{dqn_forward.1} parent=1 // pred_check_branch
      %37 = sbr.rel (0) target = $region13
    $region12: #{dqn_forward.1} parent=1 // pred_region
      %s39 = ssub.s32 4096, 4096
      %40 = vsyncadd [#allocation6], %s39
      %s41 = sshll.u32 [#allocation7], 4
      %s42 = int_to_ptr.vmem [resolvable:$true] %s41
      %47 = dma.hbm_to_vmem [thread:$0]  %s2, 4096, %s42, [#allocation6], 64, 64, 4
    $region13: #{dqn_forward.1} parent=1 // pred_fallthru
      _
    // Predicated region
    $region14: #{dqn_forward.1} parent=1 // pred_check
      _
    $region15: #{dqn_forward.1} parent=1 // pred_check_branch
      %49 = sbr.rel (0) target = $region17
    $region16: #{dqn_forward.1} parent=1 // pred_region
      %s51 = ssub.s32 2048, 2048
      %52 = vsyncadd [#allocation9], %s51
      %s53 = sshll.u32 [#allocation8], 4
      %s54 = int_to_ptr.vmem [resolvable:$true] %s53
      %59 = dma.hbm_to_vmem [thread:$0]  %s3, 2048, %s54, [#allocation9], 128, 128, 8
    $region17: #{dqn_forward.1} parent=1 // pred_fallthru
      _
    // Predicated region
    $region18: #{dqn_forward.1} parent=1 // pred_check
      _
    $region19: #{dqn_forward.1} parent=1 // pred_check_branch
      %61 = sbr.rel (0) target = $region21
    $region20: #{dqn_forward.1} parent=1 // pred_region
      %s63 = ssub.s32 256, 256
      %64 = vsyncadd [#allocation9], %s63
      %s66 = sshll.u32 [#allocation10], 4
      %s67 = int_to_ptr.vmem [resolvable:$true] %s66
      %69 = dma.hbm_to_vmem [thread:$0]  %s4, 256, %s67, [#allocation9]
    $region21: #{dqn_forward.1} parent=1 // pred_fallthru
      _
    // Predicated region
    $region22: #{dqn_forward.1} parent=1 // pred_check
      _
    $region23: #{dqn_forward.1} parent=1 // pred_check_branch
      %71 = sbr.rel (0) target = $region25
    $region24: #{dqn_forward.1} parent=1 // pred_region
      %72 = dma.done [#allocation3], 32
    $region25: #{dqn_forward.1} parent=1 // pred_fallthru
      _
    // Predicated region
    $region26: #{dqn_forward.1} parent=1 // pred_check
      _
    $region27: #{dqn_forward.1} parent=1 // pred_check_branch
      %74 = sbr.rel (0) target = $region29
    $region28: #{dqn_forward.1} parent=1 // pred_region
      %75 = dma.done [#allocation6], 2048
    $region29: #{dqn_forward.1} parent=1 // pred_fallthru
      _
    // Predicated region
    $region30: #{dqn_forward.1} parent=1 // pred_check
      _
    $region31: #{dqn_forward.1} parent=1 // pred_check_branch
      %77 = sbr.rel (0) target = $region33
    $region32: #{dqn_forward.1} parent=1 // pred_region
      %78 = dma.done [#allocation6], 4096
    $region33: #{dqn_forward.1} parent=1 // pred_fallthru
      _
    // Predicated region
    $region34: #{dqn_forward.1} parent=1 // pred_check
      _
    $region35: #{dqn_forward.1} parent=1 // pred_check_branch
      %80 = sbr.rel (0) target = $region37
    $region36: #{dqn_forward.1} parent=1 // pred_region
      %81 = dma.done [#allocation9], 2048
    $region37: #{dqn_forward.1} parent=1 // pred_fallthru
      _
    // Predicated region
    $region38: #{dqn_forward.1} parent=1 // pred_check
      _
    $region39: #{dqn_forward.1} parent=1 // pred_check_branch
      %83 = sbr.rel (0) target = $region41
    $region40: #{dqn_forward.1} parent=1 // pred_region
      %84 = dma.done [#allocation9], 256
    $region41: #{dqn_forward.1} parent=1 // pred_fallthru
      _
    %v86 = vld [vmem:[#allocation10] sm:$0xff]
    %v87 = vld [vmem:[#allocation10 + $0x8] sm:$0xff]
    %v88 = vld [vmem:[#allocation2] sm:$0x3]
    %v89 = vpack.c.bf16 %v88, %v88
    %v90 = vld [vmem:[#allocation5] sm:$0xff]
    %v91 = vld [vmem:[#allocation5 + $0x8] sm:$0xff]
    %v92 = vld [vmem:[#allocation5 + $0x10] sm:$0xff]
    %v93 = vld [vmem:[#allocation5 + $0x18] sm:$0xff]
    %v94 = vld [vmem:[#allocation5 + $0x20] sm:$0xff]
    %v95 = vld [vmem:[#allocation5 + $0x28] sm:$0xff]
    %v96 = vld [vmem:[#allocation5 + $0x30] sm:$0xff]
    %v97 = vld [vmem:[#allocation5 + $0x38] sm:$0xff]
    %v98 = vld [vmem:[#allocation5 + $0x40] sm:$0xff]
    %v99 = vld [vmem:[#allocation5 + $0x48] sm:$0xff]
    %v100 = vld [vmem:[#allocation5 + $0x50] sm:$0xff]
    %v101 = vld [vmem:[#allocation5 + $0x58] sm:$0xff]
    %v102 = vld [vmem:[#allocation5 + $0x60] sm:$0xff]
    %v103 = vld [vmem:[#allocation5 + $0x68] sm:$0xff]
    %v104 = vld [vmem:[#allocation5 + $0x70] sm:$0xff]
    %v105 = vld [vmem:[#allocation5 + $0x78] sm:$0xff]
    %v108 = vlaneseq
    %v109 = vshrl.u32 %v108, 7
    %v110 = vsub.s32 0, %v109
    %v111 = vrot.slane %v86, %v110
    %v112 = vlaneseq
    %v113 = vshrl.u32 %v112, 7
    %v114 = vsub.s32 4, %v113
    %v115 = vrot.slane %v86, %v114
    %v116 = vlaneseq
    %v117 = vshrl.u32 %v116, 7
    %v118 = vsub.s32 0, %v117
    %v119 = vrot.slane %v87, %v118
    %v120 = vlaneseq
    %v121 = vshrl.u32 %v120, 7
    %v122 = vsub.s32 4, %v121
    %v123 = vrot.slane %v87, %v122
    %v128 = vlaneseq
    %v129 = vshrl.u32 %v128, 7
    %v130 = vsub.s32 0, %v129
    %v131 = vrot.slane %v111, %v130
    %v132 = vlaneseq
    %v133 = vshrl.u32 %v132, 7
    %v134 = vsub.s32 0, %v133
    %v135 = vrot.slane %v115, %v134
    %v136 = vlaneseq
    %v137 = vshrl.u32 %v136, 7
    %v138 = vsub.s32 0, %v137
    %v139 = vrot.slane %v119, %v138
    %v140 = vlaneseq
    %v141 = vshrl.u32 %v140, 7
    %v142 = vsub.s32 0, %v141
    %v143 = vrot.slane %v123, %v142
    %v160 = vunpack.c.l.b16 %v90
    %v161 = vunpack.c.h.b16 %v90
    %v162 = vunpack.c.l.b16 %v91
    %v163 = vunpack.c.h.b16 %v91
    %v164 = vunpack.c.l.b16 %v92
    %v165 = vunpack.c.h.b16 %v92
    %v166 = vunpack.c.l.b16 %v93
    %v167 = vunpack.c.h.b16 %v93
    %v168 = vunpack.c.l.b16 %v94
    %v169 = vunpack.c.h.b16 %v94
    %v170 = vunpack.c.l.b16 %v95
    %v171 = vunpack.c.h.b16 %v95
    %v172 = vunpack.c.l.b16 %v96
    %v173 = vunpack.c.h.b16 %v96
    %v174 = vunpack.c.l.b16 %v97
    %v175 = vunpack.c.h.b16 %v97
    %v176 = vunpack.c.l.b16 %v98
    %v177 = vunpack.c.h.b16 %v98
    %v178 = vunpack.c.l.b16 %v99
    %v179 = vunpack.c.h.b16 %v99
    %v180 = vunpack.c.l.b16 %v100
    %v181 = vunpack.c.h.b16 %v100
    %v182 = vunpack.c.l.b16 %v101
    %v183 = vunpack.c.h.b16 %v101
    %v184 = vunpack.c.l.b16 %v102
    %v185 = vunpack.c.h.b16 %v102
    %v186 = vunpack.c.l.b16 %v103
    %v187 = vunpack.c.h.b16 %v103
    %v188 = vunpack.c.l.b16 %v104
    %v189 = vunpack.c.h.b16 %v104
    %v190 = vunpack.c.l.b16 %v105
    %v191 = vunpack.c.h.b16 %v105
    %v192 = vpack.c.b16 %v164, %v160
    %v193 = vpack.c.b16 %v165, %v161
    %v194 = vpack.c.b16 %v166, %v162
    %v195 = vpack.c.b16 %v167, %v163
    %v196 = vpack.c.b16 %v172, %v168
    %v197 = vpack.c.b16 %v173, %v169
    %v198 = vpack.c.b16 %v174, %v170
    %v199 = vpack.c.b16 %v175, %v171
    %v200 = vpack.c.b16 %v180, %v176
    %v201 = vpack.c.b16 %v181, %v177
    %v202 = vpack.c.b16 %v182, %v178
    %v203 = vpack.c.b16 %v183, %v179
    %v204 = vpack.c.b16 %v188, %v184
    %v205 = vpack.c.b16 %v189, %v185
    %v206 = vpack.c.b16 %v190, %v186
    %v207 = vpack.c.b16 %v191, %v187
    %vm224 = vcmask 523264
    %v226 = vsel %vm224, %v89, 0
    %228 = vmatprep.subr.bf16.mxu0 %v193
    %229 = vmatpush1.bf16.msra.mxu0 %v192
    %230 = vmatprep.subr.bf16.mxu0 %v197
    %231 = vmatpush1.bf16.msra.mxu0 %v196
    %232 = vmatprep.subr.bf16.mxu0 %v201
    %233 = vmatpush1.bf16.msra.mxu0 %v200
    %234 = vmatprep.subr.bf16.mxu0 %v205
    %235 = vmatpush1.bf16.msra.mxu0 %v204
    %236 = vmatprep.subr.bf16.mxu0 0
    %237 = vmatpush1.bf16.msra.mxu0 0
    %238 = vmatprep.subr.bf16.mxu0 0
    %239 = vmatpush1.bf16.msra.mxu0 0
    %240 = vmatprep.subr.bf16.mxu0 0
    %241 = vmatpush1.bf16.msra.mxu0 0
    %242 = vmatprep.subr.bf16.mxu0 0
    %243 = vmatpush1.bf16.msra.mxu0 0
    %244 = vmatprep.subr.bf16.mxu0 0
    %245 = vmatpush1.bf16.msra.mxu0 0
    %246 = vmatprep.subr.bf16.mxu0 0
    %247 = vmatpush1.bf16.msra.mxu0 0
    %248 = vmatprep.subr.bf16.mxu0 0
    %249 = vmatpush1.bf16.msra.mxu0 0
    %250 = vmatprep.subr.bf16.mxu0 0
    %251 = vmatpush1.bf16.msra.mxu0 0
    %252 = vmatprep.subr.bf16.mxu0 0
    %253 = vmatpush1.bf16.msra.mxu0 0
    %254 = vmatprep.subr.bf16.mxu0 0
    %255 = vmatpush1.bf16.msra.mxu0 0
    %256 = vmatprep.subr.bf16.mxu0 0
    %257 = vmatpush1.bf16.msra.mxu0 0
    %258 = vmatprep.subr.bf16.mxu0 0
    %259 = vmatpush1.bf16.msra.mxu0 0
    %260 = vmatprep.mubr.bf16.mxu0 0
    %261 = vmatmul.mubr.bf16.gmra.mrb[0].mxu0 %v226
    %v262 = vpop.f32.mrb[0].mxu0
    %v263 = vadd.f32 %v131, %v262
    %v264 = vpop.f32.mrb[0].mxu0
    %v265 = vadd.f32 %v135, %v264
    %v266 = vpop.f32.mrb[0].mxu0
    %v267 = vpop.f32.mrb[0].mxu0
    %268 = vdwg.mxu0
    %269 = vmatprep.subr.bf16.mxu0 %v195
    %270 = vmatpush1.bf16.msra.mxu0 %v194
    %271 = vmatprep.subr.bf16.mxu0 %v199
    %272 = vmatpush1.bf16.msra.mxu0 %v198
    %273 = vmatprep.subr.bf16.mxu0 %v203
    %274 = vmatpush1.bf16.msra.mxu0 %v202
    %275 = vmatprep.subr.bf16.mxu0 %v207
    %276 = vmatpush1.bf16.msra.mxu0 %v206
    %277 = vmatprep.subr.bf16.mxu0 0
    %278 = vmatpush1.bf16.msra.mxu0 0
    %279 = vmatprep.subr.bf16.mxu0 0
    %280 = vmatpush1.bf16.msra.mxu0 0
    %281 = vmatprep.subr.bf16.mxu0 0
    %282 = vmatpush1.bf16.msra.mxu0 0
    %283 = vmatprep.subr.bf16.mxu0 0
    %284 = vmatpush1.bf16.msra.mxu0 0
    %285 = vmatprep.subr.bf16.mxu0 0
    %286 = vmatpush1.bf16.msra.mxu0 0
    %287 = vmatprep.subr.bf16.mxu0 0
    %288 = vmatpush1.bf16.msra.mxu0 0
    %289 = vmatprep.subr.bf16.mxu0 0
    %290 = vmatpush1.bf16.msra.mxu0 0
    %291 = vmatprep.subr.bf16.mxu0 0
    %292 = vmatpush1.bf16.msra.mxu0 0
    %293 = vmatprep.subr.bf16.mxu0 0
    %294 = vmatpush1.bf16.msra.mxu0 0
    %295 = vmatprep.subr.bf16.mxu0 0
    %296 = vmatpush1.bf16.msra.mxu0 0
    %297 = vmatprep.subr.bf16.mxu0 0
    %298 = vmatpush1.bf16.msra.mxu0 0
    %299 = vmatprep.subr.bf16.mxu0 0
    %300 = vmatpush1.bf16.msra.mxu0 0
    %301 = vmatprep.mubr.bf16.mxu0 0
    %302 = vmatmul.mubr.bf16.gmra.mrb[0].mxu0 %v226
    %v303 = vpop.f32.mrb[0].mxu0
    %v304 = vadd.f32 %v139, %v303
    %v305 = vpop.f32.mrb[0].mxu0
    %v306 = vadd.f32 %v143, %v305
    %v307 = vpop.f32.mrb[0].mxu0
    %v308 = vpop.f32.mrb[0].mxu0
    %309 = vdwg.mxu0
    %v310 = vmax.f32 %v263, 0.0
    %v311 = vmax.f32 %v265, 0.0
    %v312 = vmax.f32 %v304, 0.0
    %v313 = vmax.f32 %v306, 0.0
    %v314 = vpack.c.bf16 %v310, %v310
    %v315 = vpack.c.bf16 %v311, %v311
    %v316 = vpack.c.bf16 %v312, %v312
    %v317 = vpack.c.bf16 %v313, %v313
    %v318 = vld [vmem:[#allocation7] sm:$0xf]
    %v319 = vld [vmem:[#allocation7 + $0x4] sm:$0xf]
    %v320 = vld [vmem:[#allocation7 + $0x8] sm:$0xf]
    %v321 = vld [vmem:[#allocation7 + $0xc] sm:$0xf]
    %v322 = vld [vmem:[#allocation7 + $0x10] sm:$0xf]
    %v323 = vld [vmem:[#allocation7 + $0x14] sm:$0xf]
    %v324 = vld [vmem:[#allocation7 + $0x18] sm:$0xf]
    %v325 = vld [vmem:[#allocation7 + $0x1c] sm:$0xf]
    %v326 = vld [vmem:[#allocation7 + $0x20] sm:$0xf]
    %v327 = vld [vmem:[#allocation7 + $0x24] sm:$0xf]
    %v328 = vld [vmem:[#allocation7 + $0x28] sm:$0xf]
    %v329 = vld [vmem:[#allocation7 + $0x2c] sm:$0xf]
    %v330 = vld [vmem:[#allocation7 + $0x30] sm:$0xf]
    %v331 = vld [vmem:[#allocation7 + $0x34] sm:$0xf]
    %v332 = vld [vmem:[#allocation7 + $0x38] sm:$0xf]
    %v333 = vld [vmem:[#allocation7 + $0x3c] sm:$0xf]
    %v334 = vld [vmem:[#allocation7 + $0x40] sm:$0xf]
    %v335 = vld [vmem:[#allocation7 + $0x44] sm:$0xf]
    %v336 = vld [vmem:[#allocation7 + $0x48] sm:$0xf]
    %v337 = vld [vmem:[#allocation7 + $0x4c] sm:$0xf]
    %v338 = vld [vmem:[#allocation7 + $0x50] sm:$0xf]
    %v339 = vld [vmem:[#allocation7 + $0x54] sm:$0xf]
    %v340 = vld [vmem:[#allocation7 + $0x58] sm:$0xf]
    %v341 = vld [vmem:[#allocation7 + $0x5c] sm:$0xf]
    %v342 = vld [vmem:[#allocation7 + $0x60] sm:$0xf]
    %v343 = vld [vmem:[#allocation7 + $0x64] sm:$0xf]
    %v344 = vld [vmem:[#allocation7 + $0x68] sm:$0xf]
    %v345 = vld [vmem:[#allocation7 + $0x6c] sm:$0xf]
    %v346 = vld [vmem:[#allocation7 + $0x70] sm:$0xf]
    %v347 = vld [vmem:[#allocation7 + $0x74] sm:$0xf]
    %v348 = vld [vmem:[#allocation7 + $0x78] sm:$0xf]
    %v349 = vld [vmem:[#allocation7 + $0x7c] sm:$0xf]
    %v350 = vld [vmem:[#allocation7 + $0x80] sm:$0xf]
    %v351 = vld [vmem:[#allocation7 + $0x84] sm:$0xf]
    %v352 = vld [vmem:[#allocation7 + $0x88] sm:$0xf]
    %v353 = vld [vmem:[#allocation7 + $0x8c] sm:$0xf]
    %v354 = vld [vmem:[#allocation7 + $0x90] sm:$0xf]
    %v355 = vld [vmem:[#allocation7 + $0x94] sm:$0xf]
    %v356 = vld [vmem:[#allocation7 + $0x98] sm:$0xf]
    %v357 = vld [vmem:[#allocation7 + $0x9c] sm:$0xf]
    %v358 = vld [vmem:[#allocation7 + $0xa0] sm:$0xf]
    %v359 = vld [vmem:[#allocation7 + $0xa4] sm:$0xf]
    %v360 = vld [vmem:[#allocation7 + $0xa8] sm:$0xf]
    %v361 = vld [vmem:[#allocation7 + $0xac] sm:$0xf]
    %v362 = vld [vmem:[#allocation7 + $0xb0] sm:$0xf]
    %v363 = vld [vmem:[#allocation7 + $0xb4] sm:$0xf]
    %v364 = vld [vmem:[#allocation7 + $0xb8] sm:$0xf]
    %v365 = vld [vmem:[#allocation7 + $0xbc] sm:$0xf]
    %v366 = vld [vmem:[#allocation7 + $0xc0] sm:$0xf]
    %v367 = vld [vmem:[#allocation7 + $0xc4] sm:$0xf]
    %v368 = vld [vmem:[#allocation7 + $0xc8] sm:$0xf]
    %v369 = vld [vmem:[#allocation7 + $0xcc] sm:$0xf]
    %v370 = vld [vmem:[#allocation7 + $0xd0] sm:$0xf]
    %v371 = vld [vmem:[#allocation7 + $0xd4] sm:$0xf]
    %v372 = vld [vmem:[#allocation7 + $0xd8] sm:$0xf]
    %v373 = vld [vmem:[#allocation7 + $0xdc] sm:$0xf]
    %v374 = vld [vmem:[#allocation7 + $0xe0] sm:$0xf]
    %v375 = vld [vmem:[#allocation7 + $0xe4] sm:$0xf]
    %v376 = vld [vmem:[#allocation7 + $0xe8] sm:$0xf]
    %v377 = vld [vmem:[#allocation7 + $0xec] sm:$0xf]
    %v378 = vld [vmem:[#allocation7 + $0xf0] sm:$0xf]
    %v379 = vld [vmem:[#allocation7 + $0xf4] sm:$0xf]
    %v380 = vld [vmem:[#allocation7 + $0xf8] sm:$0xf]
    %v381 = vld [vmem:[#allocation7 + $0xfc] sm:$0xf]
    %v382 = vlaneseq
    %v383 = vshrl.u32 %v382, 7
    %v384 = vsub.s32 1, %v383
    %v385 = vrot.slane %v86, %v384
    %v450 = vunpack.c.l.b16 %v318
    %v451 = vunpack.c.l.b16 %v319
    %v452 = vunpack.c.l.b16 %v320
    %v453 = vunpack.c.l.b16 %v321
    %v454 = vunpack.c.l.b16 %v322
    %v455 = vunpack.c.l.b16 %v323
    %v456 = vunpack.c.l.b16 %v324
    %v457 = vunpack.c.l.b16 %v325
    %v458 = vunpack.c.l.b16 %v326
    %v459 = vunpack.c.l.b16 %v327
    %v460 = vunpack.c.l.b16 %v328
    %v461 = vunpack.c.l.b16 %v329
    %v462 = vunpack.c.l.b16 %v330
    %v463 = vunpack.c.l.b16 %v331
    %v464 = vunpack.c.l.b16 %v332
    %v465 = vunpack.c.l.b16 %v333
    %v466 = vunpack.c.l.b16 %v334
    %v467 = vunpack.c.l.b16 %v335
    %v468 = vunpack.c.l.b16 %v336
    %v469 = vunpack.c.l.b16 %v337
    %v470 = vunpack.c.l.b16 %v338
    %v471 = vunpack.c.l.b16 %v339
    %v472 = vunpack.c.l.b16 %v340
    %v473 = vunpack.c.l.b16 %v341
    %v474 = vunpack.c.l.b16 %v342
    %v475 = vunpack.c.l.b16 %v343
    %v476 = vunpack.c.l.b16 %v344
    %v477 = vunpack.c.l.b16 %v345
    %v478 = vunpack.c.l.b16 %v346
    %v479 = vunpack.c.l.b16 %v347
    %v480 = vunpack.c.l.b16 %v348
    %v481 = vunpack.c.l.b16 %v349
    %v482 = vunpack.c.l.b16 %v350
    %v483 = vunpack.c.l.b16 %v351
    %v484 = vunpack.c.l.b16 %v352
    %v485 = vunpack.c.l.b16 %v353
    %v486 = vunpack.c.l.b16 %v354
    %v487 = vunpack.c.l.b16 %v355
    %v488 = vunpack.c.l.b16 %v356
    %v489 = vunpack.c.l.b16 %v357
    %v490 = vunpack.c.l.b16 %v358
    %v491 = vunpack.c.l.b16 %v359
    %v492 = vunpack.c.l.b16 %v360
    %v493 = vunpack.c.l.b16 %v361
    %v494 = vunpack.c.l.b16 %v362
    %v495 = vunpack.c.l.b16 %v363
    %v496 = vunpack.c.l.b16 %v364
    %v497 = vunpack.c.l.b16 %v365
    %v498 = vunpack.c.l.b16 %v366
    %v499 = vunpack.c.l.b16 %v367
    %v500 = vunpack.c.l.b16 %v368
    %v501 = vunpack.c.l.b16 %v369
    %v502 = vunpack.c.l.b16 %v370
    %v503 = vunpack.c.l.b16 %v371
    %v504 = vunpack.c.l.b16 %v372
    %v505 = vunpack.c.l.b16 %v373
    %v506 = vunpack.c.l.b16 %v374
    %v507 = vunpack.c.l.b16 %v375
    %v508 = vunpack.c.l.b16 %v376
    %v509 = vunpack.c.l.b16 %v377
    %v510 = vunpack.c.l.b16 %v378
    %v511 = vunpack.c.l.b16 %v379
    %v512 = vunpack.c.l.b16 %v380
    %v513 = vunpack.c.l.b16 %v381
    %v514 = vpack.c.b16 %v451, %v450
    %v515 = vpack.c.b16 %v453, %v452
    %v516 = vpack.c.b16 %v455, %v454
    %v517 = vpack.c.b16 %v457, %v456
    %v518 = vpack.c.b16 %v459, %v458
    %v519 = vpack.c.b16 %v461, %v460
    %v520 = vpack.c.b16 %v463, %v462
    %v521 = vpack.c.b16 %v465, %v464
    %v522 = vpack.c.b16 %v467, %v466
    %v523 = vpack.c.b16 %v469, %v468
    %v524 = vpack.c.b16 %v471, %v470
    %v525 = vpack.c.b16 %v473, %v472
    %v526 = vpack.c.b16 %v475, %v474
    %v527 = vpack.c.b16 %v477, %v476
    %v528 = vpack.c.b16 %v479, %v478
    %v529 = vpack.c.b16 %v481, %v480
    %v530 = vpack.c.b16 %v483, %v482
    %v531 = vpack.c.b16 %v485, %v484
    %v532 = vpack.c.b16 %v487, %v486
    %v533 = vpack.c.b16 %v489, %v488
    %v534 = vpack.c.b16 %v491, %v490
    %v535 = vpack.c.b16 %v493, %v492
    %v536 = vpack.c.b16 %v495, %v494
    %v537 = vpack.c.b16 %v497, %v496
    %v538 = vpack.c.b16 %v499, %v498
    %v539 = vpack.c.b16 %v501, %v500
    %v540 = vpack.c.b16 %v503, %v502
    %v541 = vpack.c.b16 %v505, %v504
    %v542 = vpack.c.b16 %v507, %v506
    %v543 = vpack.c.b16 %v509, %v508
    %v544 = vpack.c.b16 %v511, %v510
    %v545 = vpack.c.b16 %v513, %v512
    %578 = vmatprep.subr.bf16.mxu0 0
    %579 = vmatpush1.bf16.msra.mxu0 %v514
    %580 = vmatprep.subr.bf16.mxu0 0
    %581 = vmatpush1.bf16.msra.mxu0 %v515
    %582 = vmatprep.subr.bf16.mxu0 0
    %583 = vmatpush1.bf16.msra.mxu0 %v516
    %584 = vmatprep.subr.bf16.mxu0 0
    %585 = vmatpush1.bf16.msra.mxu0 %v517
    %586 = vmatprep.subr.bf16.mxu0 0
    %587 = vmatpush1.bf16.msra.mxu0 %v518
    %588 = vmatprep.subr.bf16.mxu0 0
    %589 = vmatpush1.bf16.msra.mxu0 %v519
    %590 = vmatprep.subr.bf16.mxu0 0
    %591 = vmatpush1.bf16.msra.mxu0 %v520
    %592 = vmatprep.subr.bf16.mxu0 0
    %593 = vmatpush1.bf16.msra.mxu0 %v521
    %594 = vmatprep.subr.bf16.mxu0 0
    %595 = vmatpush1.bf16.msra.mxu0 %v522
    %596 = vmatprep.subr.bf16.mxu0 0
    %597 = vmatpush1.bf16.msra.mxu0 %v523
    %598 = vmatprep.subr.bf16.mxu0 0
    %599 = vmatpush1.bf16.msra.mxu0 %v524
    %600 = vmatprep.subr.bf16.mxu0 0
    %601 = vmatpush1.bf16.msra.mxu0 %v525
    %602 = vmatprep.subr.bf16.mxu0 0
    %603 = vmatpush1.bf16.msra.mxu0 %v526
    %604 = vmatprep.subr.bf16.mxu0 0
    %605 = vmatpush1.bf16.msra.mxu0 %v527
    %606 = vmatprep.subr.bf16.mxu0 0
    %607 = vmatpush1.bf16.msra.mxu0 %v528
    %608 = vmatprep.subr.bf16.mxu0 0
    %609 = vmatpush1.bf16.msra.mxu0 %v529
    %610 = vmatprep.mubr.bf16.mxu0 %v315
    %611 = vmatmul.mubr.bf16.gmra.mrb[0].mxu0 %v314
    %v612 = vpop.f32.mrb[0].mxu0
    %v613 = vadd.f32 %v385, %v612
    %v614 = vpop.f32.mrb[0].mxu0
    %v615 = vpop.f32.mrb[0].mxu0
    %v616 = vpop.f32.mrb[0].mxu0
    %617 = vdwg.mxu0
    %618 = vmatprep.subr.bf16.mxu0 0
    %619 = vmatpush1.bf16.msra.mxu0 %v530
    %620 = vmatprep.subr.bf16.mxu0 0
    %621 = vmatpush1.bf16.msra.mxu0 %v531
    %622 = vmatprep.subr.bf16.mxu0 0
    %623 = vmatpush1.bf16.msra.mxu0 %v532
    %624 = vmatprep.subr.bf16.mxu0 0
    %625 = vmatpush1.bf16.msra.mxu0 %v533
    %626 = vmatprep.subr.bf16.mxu0 0
    %627 = vmatpush1.bf16.msra.mxu0 %v534
    %628 = vmatprep.subr.bf16.mxu0 0
    %629 = vmatpush1.bf16.msra.mxu0 %v535
    %630 = vmatprep.subr.bf16.mxu0 0
    %631 = vmatpush1.bf16.msra.mxu0 %v536
    %632 = vmatprep.subr.bf16.mxu0 0
    %633 = vmatpush1.bf16.msra.mxu0 %v537
    %634 = vmatprep.subr.bf16.mxu0 0
    %635 = vmatpush1.bf16.msra.mxu0 %v538
    %636 = vmatprep.subr.bf16.mxu0 0
    %637 = vmatpush1.bf16.msra.mxu0 %v539
    %638 = vmatprep.subr.bf16.mxu0 0
    %639 = vmatpush1.bf16.msra.mxu0 %v540
    %640 = vmatprep.subr.bf16.mxu0 0
    %641 = vmatpush1.bf16.msra.mxu0 %v541
    %642 = vmatprep.subr.bf16.mxu0 0
    %643 = vmatpush1.bf16.msra.mxu0 %v542
    %644 = vmatprep.subr.bf16.mxu0 0
    %645 = vmatpush1.bf16.msra.mxu0 %v543
    %646 = vmatprep.subr.bf16.mxu0 0
    %647 = vmatpush1.bf16.msra.mxu0 %v544
    %648 = vmatprep.subr.bf16.mxu0 0
    %649 = vmatpush1.bf16.msra.mxu0 %v545
    %650 = vmatprep.mubr.bf16.mxu0 %v317
    %651 = vmatmul.mubr.bf16.gmra.mrb[0].mxu0 %v316
    %v652 = vpop.f32.mrb[0].mxu0
    %v653 = vadd.f32 %v613, %v652
    %v654 = vpop.f32.mrb[0].mxu0
    %v655 = vpop.f32.mrb[0].mxu0
    %v656 = vpop.f32.mrb[0].mxu0
    %657 = vdwg.mxu0
    %v658 = vmax.f32 %v653, 0.0
    %v659 = vld [vmem:[#allocation8] sm:$0xff]
    %v660 = vld [vmem:[#allocation8 + $0x8] sm:$0xff]
    %v661 = vld [vmem:[#allocation8 + $0x10] sm:$0xff]
    %v662 = vld [vmem:[#allocation8 + $0x18] sm:$0xff]
    %v663 = vld [vmem:[#allocation8 + $0x20] sm:$0xff]
    %v664 = vld [vmem:[#allocation8 + $0x28] sm:$0xff]
    %v665 = vld [vmem:[#allocation8 + $0x30] sm:$0xff]
    %v666 = vld [vmem:[#allocation8 + $0x38] sm:$0xff]
    %v667 = vld [vmem:[#allocation8 + $0x40] sm:$0xff]
    %v668 = vld [vmem:[#allocation8 + $0x48] sm:$0xff]
    %v669 = vld [vmem:[#allocation8 + $0x50] sm:$0xff]
    %v670 = vld [vmem:[#allocation8 + $0x58] sm:$0xff]
    %v671 = vld [vmem:[#allocation8 + $0x60] sm:$0xff]
    %v672 = vld [vmem:[#allocation8 + $0x68] sm:$0xff]
    %v673 = vld [vmem:[#allocation8 + $0x70] sm:$0xff]
    %v674 = vld [vmem:[#allocation8 + $0x78] sm:$0xff]
    %v675 = vpack.c.bf16 %v658, %v658
    %v676 = vlaneseq
    %v677 = vshrl.u32 %v676, 7
    %v678 = vsub.s32 2, %v677
    %v679 = vrot.slane %v86, %v678
    %v696 = vunpack.c.l.b16 %v659
    %v697 = vunpack.c.l.b16 %v660
    %v698 = vunpack.c.l.b16 %v661
    %v699 = vunpack.c.l.b16 %v662
    %v700 = vunpack.c.l.b16 %v663
    %v701 = vunpack.c.l.b16 %v664
    %v702 = vunpack.c.l.b16 %v665
    %v703 = vunpack.c.l.b16 %v666
    %v704 = vunpack.c.l.b16 %v667
    %v705 = vunpack.c.l.b16 %v668
    %v706 = vunpack.c.l.b16 %v669
    %v707 = vunpack.c.l.b16 %v670
    %v708 = vunpack.c.l.b16 %v671
    %v709 = vunpack.c.l.b16 %v672
    %v710 = vunpack.c.l.b16 %v673
    %v711 = vunpack.c.l.b16 %v674
    %v712 = vpack.c.b16 %v697, %v696
    %v713 = vpack.c.b16 %v699, %v698
    %v714 = vpack.c.b16 %v701, %v700
    %v715 = vpack.c.b16 %v703, %v702
    %v716 = vpack.c.b16 %v705, %v704
    %v717 = vpack.c.b16 %v707, %v706
    %v718 = vpack.c.b16 %v709, %v708
    %v719 = vpack.c.b16 %v711, %v710
    %728 = vmatprep.subr.bf16.mxu0 0
    %729 = vmatpush1.bf16.msra.mxu0 %v712
    %730 = vmatprep.subr.bf16.mxu0 0
    %731 = vmatpush1.bf16.msra.mxu0 %v713
    %732 = vmatprep.subr.bf16.mxu0 0
    %733 = vmatpush1.bf16.msra.mxu0 %v714
    %734 = vmatprep.subr.bf16.mxu0 0
    %735 = vmatpush1.bf16.msra.mxu0 %v715
    %736 = vmatprep.subr.bf16.mxu0 0
    %737 = vmatpush1.bf16.msra.mxu0 %v716
    %738 = vmatprep.subr.bf16.mxu0 0
    %739 = vmatpush1.bf16.msra.mxu0 %v717
    %740 = vmatprep.subr.bf16.mxu0 0
    %741 = vmatpush1.bf16.msra.mxu0 %v718
    %742 = vmatprep.subr.bf16.mxu0 0
    %743 = vmatpush1.bf16.msra.mxu0 %v719
    %744 = vmatprep.subr.bf16.mxu0 0
    %745 = vmatpush1.bf16.msra.mxu0 0
    %746 = vmatprep.subr.bf16.mxu0 0
    %747 = vmatpush1.bf16.msra.mxu0 0
    %748 = vmatprep.subr.bf16.mxu0 0
    %749 = vmatpush1.bf16.msra.mxu0 0
    %750 = vmatprep.subr.bf16.mxu0 0
    %751 = vmatpush1.bf16.msra.mxu0 0
    %752 = vmatprep.subr.bf16.mxu0 0
    %753 = vmatpush1.bf16.msra.mxu0 0
    %754 = vmatprep.subr.bf16.mxu0 0
    %755 = vmatpush1.bf16.msra.mxu0 0
    %756 = vmatprep.subr.bf16.mxu0 0
    %757 = vmatpush1.bf16.msra.mxu0 0
    %758 = vmatprep.subr.bf16.mxu0 0
    %759 = vmatpush1.bf16.msra.mxu0 0
    %760 = vmatprep.mubr.bf16.mxu0 0
    %761 = vmatmul.mubr.bf16.gmra.mrb[0].mxu0 %v675
    %v762 = vpop.f32.mrb[0].mxu0
    %v763 = vadd.f32 %v679, %v762
    %v764 = vpop.f32.mrb[0].mxu0
    %v765 = vpop.f32.mrb[0].mxu0
    %v766 = vpop.f32.mrb[0].mxu0
    %767 = vdwg.mxu0
    %v768 = vmax.f32 %v763, 0.0
    %v769 = vpack.c.bf16 %v768, %v768
    %v770 = vlaneseq
    %v771 = vshrl.u32 %v770, 7
    %v772 = vsub.s32 3, %v771
    %v773 = vrot.slane %v86, %v772
    %v774 = vunpack.c.h.b16 %v659
    %v775 = vunpack.c.h.b16 %v660
    %v776 = vunpack.c.h.b16 %v661
    %v777 = vunpack.c.h.b16 %v662
    %v778 = vunpack.c.h.b16 %v663
    %v779 = vunpack.c.h.b16 %v664
    %v780 = vunpack.c.h.b16 %v665
    %v781 = vunpack.c.h.b16 %v666
    %v782 = vunpack.c.h.b16 %v667
    %v783 = vunpack.c.h.b16 %v668
    %v784 = vunpack.c.h.b16 %v669
    %v785 = vunpack.c.h.b16 %v670
    %v786 = vunpack.c.h.b16 %v671
    %v787 = vunpack.c.h.b16 %v672
    %v788 = vunpack.c.h.b16 %v673
    %v789 = vunpack.c.h.b16 %v674
    %v790 = vpack.c.b16 %v775, %v774
    %v791 = vpack.c.b16 %v777, %v776
    %v792 = vpack.c.b16 %v779, %v778
    %v793 = vpack.c.b16 %v781, %v780
    %v794 = vpack.c.b16 %v783, %v782
    %v795 = vpack.c.b16 %v785, %v784
    %v796 = vpack.c.b16 %v787, %v786
    %v797 = vpack.c.b16 %v789, %v788
    %806 = vmatprep.subr.bf16.mxu0 0
    %807 = vmatpush1.bf16.msra.mxu0 %v790
    %808 = vmatprep.subr.bf16.mxu0 0
    %809 = vmatpush1.bf16.msra.mxu0 %v791
    %810 = vmatprep.subr.bf16.mxu0 0
    %811 = vmatpush1.bf16.msra.mxu0 %v792
    %812 = vmatprep.subr.bf16.mxu0 0
    %813 = vmatpush1.bf16.msra.mxu0 %v793
    %814 = vmatprep.subr.bf16.mxu0 0
    %815 = vmatpush1.bf16.msra.mxu0 %v794
    %816 = vmatprep.subr.bf16.mxu0 0
    %817 = vmatpush1.bf16.msra.mxu0 %v795
    %818 = vmatprep.subr.bf16.mxu0 0
    %819 = vmatpush1.bf16.msra.mxu0 %v796
    %820 = vmatprep.subr.bf16.mxu0 0
    %821 = vmatpush1.bf16.msra.mxu0 %v797
    %822 = vmatprep.subr.bf16.mxu0 0
    %823 = vmatpush1.bf16.msra.mxu0 0
    %824 = vmatprep.subr.bf16.mxu0 0
    %825 = vmatpush1.bf16.msra.mxu0 0
    %826 = vmatprep.subr.bf16.mxu0 0
    %827 = vmatpush1.bf16.msra.mxu0 0
    %828 = vmatprep.subr.bf16.mxu0 0
    %829 = vmatpush1.bf16.msra.mxu0 0
    %830 = vmatprep.subr.bf16.mxu0 0
    %831 = vmatpush1.bf16.msra.mxu0 0
    %832 = vmatprep.subr.bf16.mxu0 0
    %833 = vmatpush1.bf16.msra.mxu0 0
    %834 = vmatprep.subr.bf16.mxu0 0
    %835 = vmatpush1.bf16.msra.mxu0 0
    %836 = vmatprep.subr.bf16.mxu0 0
    %837 = vmatpush1.bf16.msra.mxu0 0
    %838 = vmatprep.mubr.bf16.mxu0 0
    %839 = vmatmul.mubr.bf16.gmra.mrb[0].mxu0 %v769
    %v840 = vpop.f32.mrb[0].mxu0
    %v841 = vadd.f32 %v773, %v840
    %v842 = vpop.f32.mrb[0].mxu0
    %v843 = vpop.f32.mrb[0].mxu0
    %v844 = vpop.f32.mrb[0].mxu0
    %845 = vdwg.mxu0
    %846 = vst [vmem:[#allocation11] sm:$0x3] %v841
    // Predicated region
    $region42: #{dqn_forward.1} parent=1 // pred_check
      _
    $region43: #{dqn_forward.1} parent=1 // pred_check_branch
      %848 = sbr.rel (0) target = $region45
    $region44: #{dqn_forward.1} parent=1 // pred_region
      %s850 = ssub.s32 32, 32
      %851 = vsyncadd [#allocation4], %s850
      %s853 = sshll.u32 [#allocation11], 4
      %s854 = int_to_ptr.vmem [resolvable:$true] %s853
      %856 = dma.vmem_to_hbm [thread:$0]  %s854, 32, %s5, [#allocation4]
    $region45: #{dqn_forward.1} parent=1 // pred_fallthru
      _
    // Predicated region
    $region46: #{dqn_forward.1} parent=1 // pred_check
      _
    $region47: #{dqn_forward.1} parent=1 // pred_check_branch
      %858 = sbr.rel (0) target = $region49
    $region48: #{dqn_forward.1} parent=1 // pred_region
      %859 = dma.done [#allocation4], 32
    $region49: #{dqn_forward.1} parent=1 // pred_fallthru
      _
    %860 = vsyncpa [#allocation3], 1
    %861 = vsyncpa [#allocation6], 1
    %862 = vsyncpa [#allocation9], 1
    %863 = vsyncpa [#allocation4], 1

</llo_original>
